<compile_context>
chip_gen: v6e
topology: v6e:2x2x1
jax: 0.10.0
libtpu: 0.0.40
codegen_flags: <defaults>
</compile_context>

<pallas_src>
import functools

import jax
import jax.numpy as jnp
from jax import lax
from jax.experimental import pallas as pl
from jax.experimental.pallas import tpu as pltpu

LAMBDA_ENTROPY = 0.1
EPS = 1e-6  # used only by the pure-JAX reference (PyTorch-faithful formula)


def _me_full_loss_kernel(logits_ref, targets_ref, out_ref, *, n_rows, lambda_entropy):
    i = pl.program_id(0)

    @pl.when(i == 0)
    def _init():
        out_ref[...] = jnp.zeros_like(out_ref)

    x = logits_ref[...].astype(jnp.float32)                 # (T, C)
    t, c = x.shape

    # Mask rows past the true batch size (possibly-partial last tile): zero them
    # so all math stays finite, and drop their contribution below.
    row = i * t + lax.broadcasted_iota(jnp.int32, (t, 1), 0)  # (T, 1)
    valid = row < n_rows
    x = jnp.where(valid, x, 0.0)

    # Numerically-stable softmax statistics (no full-tile probs materialized).
    m = jnp.max(x, axis=-1, keepdims=True)                   # (T, 1)
    xs = x - m                                               # (T, C)
    e = jnp.exp(xs)                                          # (T, C) -- only full-tile EUP op
    s = jnp.sum(e, axis=-1, keepdims=True)                   # (T, 1)
    log_s = jnp.log(s)                                       # (T, 1)
    inv_s = pl.reciprocal(s, approx=False)                   # (T, 1) narrow -> keep accurate

    # Cross-entropy: CE_i = logsumexp_i - x_i[target_i], computed in the shifted
    # domain:  CE_i = log(s_i) - (x_i[target_i] - m_i).  No one-hot materialized.
    col = lax.broadcasted_iota(jnp.int32, (t, c), 1)         # (T, C)
    tgt_xs = jnp.sum(jnp.where(col == targets_ref[...], xs, 0.0),
                     axis=-1, keepdims=True)                 # (T, 1)
    ce_row = log_s - tgt_xs

    # Entropy: H_i = log(s_i) - sum_j p_ij * (x_ij - m_i)  (no second full-tile log).
    ent_row = log_s - jnp.sum(e * xs, axis=-1, keepdims=True) * inv_s

    total_row = jnp.where(valid, ce_row - lambda_entropy * ent_row, 0.0)  # (T, 1)
    out_ref[...] += jnp.sum(total_row, keepdims=True)        # (1, 1) running sum

    @pl.when(i == pl.num_programs(0) - 1)
    def _finalize():
        out_ref[...] = out_ref[...] * jnp.float32(1.0 / n_rows)


def _device_vmem_bytes():
    try:
        return int(pltpu.get_tpu_info().vmem_capacity_bytes)
    except Exception:
        return 64 * 1024 * 1024  # conservative default (v7x per-TC VMEM)


def _default_vmem_limit():
    phys = _device_vmem_bytes()
    # Raise above the 16/32 MiB scoped defaults but leave headroom on every gen.
    return max(32 * 1024 * 1024, min(96 * 1024 * 1024, (phys * 3) // 5))


def _choose_tile_n(n, c, itemsize, vmem_limit):
    # Budget: double-buffered input tile + ~6 f32 full-tile temporaries + targets.
    per_row = c * (2 * itemsize + 6 * 4) + 2 * 4
    budget = max(vmem_limit // 3, 1 << 20)
    tile = budget // per_row
    if tile >= n:
        return n  # single block uses the full array dims (no alignment constraint)
    tile = min(int(tile), 1024)
    tile = (tile // 32) * 32  # multiple of 32 keeps f32 / bf16 sublane tiling legal
    return max(32, tile)


def me_full_loss(logits, targets, *, lambda_entropy=LAMBDA_ENTROPY, tile_n=None):
    """MEFullLoss forward: mean CE(logits, targets) - lambda * mean entropy(softmax(logits))."""
    n, c = logits.shape
    targets2d = targets.astype(jnp.int32).reshape(n, 1)

    vmem_limit = _default_vmem_limit()
    if tile_n is None:
        tile_n = _choose_tile_n(n, c, jnp.dtype(logits.dtype).itemsize, vmem_limit)
    tile_n = min(int(tile_n), n)
    num_tiles = pl.cdiv(n, tile_n)

    kernel = functools.partial(
        _me_full_loss_kernel, n_rows=n, lambda_entropy=lambda_entropy
    )

    out = pl.pallas_call(
        kernel,
        out_shape=jax.ShapeDtypeStruct((1, 1), jnp.float32),
        grid_spec=pltpu.PrefetchScalarGridSpec(
            num_scalar_prefetch=0,
            grid=(num_tiles,),
            in_specs=[
                pl.BlockSpec((tile_n, c), lambda i: (i, 0)),   # logits, native dtype
                pl.BlockSpec((tile_n, 1), lambda i: (i, 0)),   # targets (int32)
            ],
            out_specs=pl.BlockSpec((1, 1), lambda i: (0, 0)),  # resident accumulator
        ),
        compiler_params=pltpu.CompilerParams(
            dimension_semantics=("arbitrary",),
            vmem_limit_bytes=vmem_limit,
        ),
    )(logits, targets2d)
    return out[0, 0]


def me_full_loss_ref(logits, targets, lambda_entropy=LAMBDA_ENTROPY):
    # Pure-JAX reference mirroring the PyTorch module (including the +EPS in the log).
    logits = logits.astype(jnp.float32)
    log_z = jax.scipy.special.logsumexp(logits, axis=-1)
    tgt_logit = jnp.take_along_axis(
        logits, targets.astype(jnp.int32)[:, None], axis=-1
    )[:, 0]
    ce = jnp.mean(log_z - tgt_logit)
    probs = jax.nn.softmax(logits, axis=-1)
    log_probs = jnp.log(probs + EPS)
    ent = jnp.mean(-jnp.sum(probs * log_probs, axis=-1))
    return ce - lambda_entropy * ent


if __name__ == "__main__":
    key = jax.random.PRNGKey(0)
    k1, k2, k3, k4, k5, k6 = jax.random.split(key, 6)

    # Kernel drops the +1e-6 inside the entropy log (exact log-softmax identity);
    # deviation from the reference is bounded by lambda * C * eps << 1e-4 here.
    ATOL, RTOL = 1e-4, 1e-5

    # 1) Small sanity case: single full-dim block.
    n1, c1 = 8, 32
    logits1 = jax.random.normal(k1, (n1, c1), dtype=jnp.float32)
    targets1 = jax.random.randint(k2, (n1,), 0, c1, dtype=jnp.int32)
    out1 = jax.block_until_ready(me_full_loss(logits1, targets1))
    ref1 = me_full_loss_ref(logits1, targets1)
    assert jnp.allclose(out1, ref1, atol=ATOL, rtol=RTOL), (out1, ref1)

    # 2) Row-tiled case with a partial last tile (exercises masking + accumulation).
    n2, c2 = 300, 160
    logits2 = 3.0 * jax.random.normal(k3, (n2, c2), dtype=jnp.float32)
    targets2 = jax.random.randint(k4, (n2,), 0, c2, dtype=jnp.int32)
    out2 = jax.block_until_ready(me_full_loss(logits2, targets2, tile_n=128))
    ref2 = me_full_loss_ref(logits2, targets2)
    assert jnp.allclose(out2, ref2, atol=ATOL, rtol=RTOL), (out2, ref2)

    # 3) bf16 logits read natively by the kernel (no wrapper-side upcast to f32).
    n3, c3 = 192, 256
    logits3 = jax.random.normal(k5, (n3, c3), dtype=jnp.float32).astype(jnp.bfloat16)
    targets3 = jax.random.randint(k6, (n3,), 0, c3, dtype=jnp.int32)
    out3 = jax.block_until_ready(me_full_loss(logits3, targets3, tile_n=64))
    ref3 = me_full_loss_ref(logits3, targets3)
    assert jnp.allclose(out3, ref3, atol=ATOL, rtol=RTOL), (out3, ref3)

    print("KERNEL_OK")
</pallas_src>

<mosaic_0001>
module attributes {stable_mosaic.version = 11 : i64} {
  func.func @_me_full_loss_kernel(%arg0: i32, %arg1: memref<8x32xf32, #tpu.memory_space<vmem>>, %arg2: memref<8x1xi32, #tpu.memory_space<vmem>>, %arg3: memref<1x1xf32, #tpu.memory_space<vmem>>) attributes {dimension_semantics = [#tpu.dimension_semantics<arbitrary>], iteration_bounds = array<i64: 1>, scalar_prefetch = 0 : i64, scratch_operands = 0 : i64, tpu.core_type = #tpu.core_type<tc>, window_params = [{transform_indices = @transform_0, window_bounds = array<i64: 8, 32>}, {transform_indices = @transform_1, window_bounds = array<i64: 8, 1>}, {pipeline_mode = #tpu.pipeline_mode<synchronous>, transform_indices = @transform_2, window_bounds = array<i64: 1, 1>}]} {
    %c0_i32 = arith.constant 0 : i32
    %0 = arith.cmpi eq, %arg0, %c0_i32 : i32
    %1 = arith.extui %0 : i1 to i32
    %c0_i32_0 = arith.constant 0 : i32
    %2 = arith.cmpi ne, %1, %c0_i32_0 : i32
    scf.if %2 {
      %cst_19 = arith.constant 0.000000e+00 : f32
      %53 = vector.broadcast %cst_19 : f32 to vector<1x1xf32>
      %c0_20 = arith.constant 0 : index
      %c0_21 = arith.constant 0 : index
      %54 = vector.load %arg3[%c0_20, %c0_21] : memref<1x1xf32, #tpu.memory_space<vmem>>, vector<1x1xf32>
      tpu.vector_store %arg3[%c0_20, %c0_21], %53 {strides = array<i32>} : memref<1x1xf32, #tpu.memory_space<vmem>>, vector<1x1xf32>,
    } else {
    }
    %c0 = arith.constant 0 : index
    %c0_1 = arith.constant 0 : index
    %3 = vector.load %arg1[%c0, %c0_1] : memref<8x32xf32, #tpu.memory_space<vmem>>, vector<8x32xf32>
    %c8_i32 = arith.constant 8 : i32
    %4 = arith.muli %arg0, %c8_i32 : i32
    %5 = tpu.iota {dimensions = array<i32: 0>} : vector<8x1xi32>
    %6 = vector.broadcast %4 : i32 to vector<8x1xi32>
    %7 = arith.addi %6, %5 : vector<8x1xi32>
    %c8_i32_2 = arith.constant 8 : i32
    %8 = vector.broadcast %c8_i32_2 : i32 to vector<8x1xi32>
    %9 = arith.cmpi slt, %7, %8 : vector<8x1xi32>
    %cst = arith.constant 0.000000e+00 : f32
    %10 = vector.shape_cast %9 : vector<8x1xi1> to vector<8x1xi1>
    %11 = vector.broadcast %10 : vector<8x1xi1> to vector<8x32xi1>
    %12 = vector.broadcast %cst : f32 to vector<8x32xf32>
    %13 = arith.select %11, %3, %12 : vector<8x32xi1>, vector<8x32xf32>
    %cst_3 = arith.constant dense<0xFF800000> : vector<8xf32>
    %14 = vector.multi_reduction <maximumf>, %13, %cst_3 [1] : vector<8x32xf32> to vector<8xf32>
    %15 = vector.shape_cast %14 : vector<8xf32> to vector<8x1xf32>
    %16 = vector.broadcast %15 : vector<8x1xf32> to vector<8x32xf32>
    %17 = arith.subf %13, %16 : vector<8x32xf32>
    %18 = math.exp %17 : vector<8x32xf32>
    %cst_4 = arith.constant dense<0.000000e+00> : vector<8xf32>
    %19 = vector.multi_reduction <add>, %18, %cst_4 [1] : vector<8x32xf32> to vector<8xf32>
    %20 = vector.shape_cast %19 : vector<8xf32> to vector<8x1xf32>
    %21 = math.log %20 : vector<8x1xf32>
    %22 = tpu.reciprocal %20 : vector<8x1xf32> -> vector<8x1xf32>
    %23 = tpu.iota {dimensions = array<i32: 1>} : vector<8x32xi32>
    %c0_5 = arith.constant 0 : index
    %c0_6 = arith.constant 0 : index
    %24 = vector.load %arg2[%c0_5, %c0_6] : memref<8x1xi32, #tpu.memory_space<vmem>>, vector<8x1xi32>
    %25 = vector.broadcast %24 : vector<8x1xi32> to vector<8x32xi32>
    %26 = arith.cmpi eq, %23, %25 : vector<8x32xi32>
    %cst_7 = arith.constant 0.000000e+00 : f32
    %27 = vector.broadcast %cst_7 : f32 to vector<8x32xf32>
    %28 = arith.select %26, %17, %27 : vector<8x32xi1>, vector<8x32xf32>
    %cst_8 = arith.constant dense<0.000000e+00> : vector<8xf32>
    %29 = vector.multi_reduction <add>, %28, %cst_8 [1] : vector<8x32xf32> to vector<8xf32>
    %30 = vector.shape_cast %29 : vector<8xf32> to vector<8x1xf32>
    %31 = arith.subf %21, %30 : vector<8x1xf32>
    %32 = arith.mulf %18, %17 : vector<8x32xf32>
    %cst_9 = arith.constant dense<0.000000e+00> : vector<8xf32>
    %33 = vector.multi_reduction <add>, %32, %cst_9 [1] : vector<8x32xf32> to vector<8xf32>
    %34 = vector.shape_cast %33 : vector<8xf32> to vector<8x1xf32>
    %35 = arith.mulf %34, %22 : vector<8x1xf32>
    %36 = arith.subf %21, %35 : vector<8x1xf32>
    %cst_10 = arith.constant 1.000000e-01 : f32
    %37 = vector.broadcast %cst_10 : f32 to vector<8x1xf32>
    %38 = arith.mulf %37, %36 : vector<8x1xf32>
    %39 = arith.subf %31, %38 : vector<8x1xf32>
    %cst_11 = arith.constant 0.000000e+00 : f32
    %40 = vector.broadcast %cst_11 : f32 to vector<8x1xf32>
    %41 = arith.select %9, %39, %40 : vector<8x1xi1>, vector<8x1xf32>
    %c0_12 = arith.constant 0 : index
    %c0_13 = arith.constant 0 : index
    %42 = vector.load %arg3[%c0_12, %c0_13] : memref<1x1xf32, #tpu.memory_space<vmem>>, vector<1x1xf32>
    %43 = vector.shape_cast %41 : vector<8x1xf32> to vector<1x8x1xf32>
    %cst_14 = arith.constant dense<0.000000e+00> : vector<1xf32>
    %44 = vector.multi_reduction <add>, %43, %cst_14 [1, 2] : vector<1x8x1xf32> to vector<1xf32>
    %45 = vector.shape_cast %44 : vector<1xf32> to vector<1x1x1xf32>
    %46 = vector.extract %45[0, 0, 0] : f32 from vector<1x1x1xf32>
    %47 = vector.broadcast %46 : f32 to vector<1x1xf32>
    %48 = arith.addf %42, %47 : vector<1x1xf32>
    %c0_15 = arith.constant 0 : index
    %c0_16 = arith.constant 0 : index
    %49 = vector.load %arg3[%c0_15, %c0_16] : memref<1x1xf32, #tpu.memory_space<vmem>>, vector<1x1xf32>
    tpu.vector_store %arg3[%c0_15, %c0_16], %48 {strides = array<i32>} : memref<1x1xf32, #tpu.memory_space<vmem>>, vector<1x1xf32>,
    %c0_i32_17 = arith.constant 0 : i32
    %50 = arith.cmpi eq, %arg0, %c0_i32_17 : i32
    %51 = arith.extui %50 : i1 to i32
    %c0_i32_18 = arith.constant 0 : i32
    %52 = arith.cmpi ne, %51, %c0_i32_18 : i32
    scf.if %52 {
      %c0_19 = arith.constant 0 : index
      %c0_20 = arith.constant 0 : index
      %53 = vector.load %arg3[%c0_19, %c0_20] : memref<1x1xf32, #tpu.memory_space<vmem>>, vector<1x1xf32>
      %cst_21 = arith.constant 1.250000e-01 : f32
      %54 = vector.broadcast %cst_21 : f32 to vector<1x1xf32>
      %55 = arith.mulf %53, %54 : vector<1x1xf32>
      %c0_22 = arith.constant 0 : index
      %c0_23 = arith.constant 0 : index
      %56 = vector.load %arg3[%c0_22, %c0_23] : memref<1x1xf32, #tpu.memory_space<vmem>>, vector<1x1xf32>
      tpu.vector_store %arg3[%c0_22, %c0_23], %55 {strides = array<i32>} : memref<1x1xf32, #tpu.memory_space<vmem>>, vector<1x1xf32>,
    } else {
    }
    return
  }
  func.func @transform_0(%arg0: i32) -> (i32, i32) {
    %c0_i32 = arith.constant 0 : i32
    %c0_i32_0 = arith.constant 0 : i32
    return %arg0, %c0_i32 : i32, i32
  }
  func.func @transform_1(%arg0: i32) -> (i32, i32) {
    %c0_i32 = arith.constant 0 : i32
    %c0_i32_0 = arith.constant 0 : i32
    return %arg0, %c0_i32 : i32, i32
  }
  func.func @transform_2(%arg0: i32) -> (i32, i32) {
    %c0_i32 = arith.constant 0 : i32
    %c0_i32_0 = arith.constant 0 : i32
    %c0_i32_1 = arith.constant 0 : i32
    return %c0_i32, %c0_i32_0 : i32, i32
  }
}

</mosaic_0001>

<llo_original>
// kernel: tpu_custom_call.1
$region0: #{tpu_custom_call.1}
  #allocation0 [shape = 'u32[]', space=smem, size = 0x4, offset = 0x4, fixed_abs, tag = 'smem constant byte address 0x4 - core index']
  #allocation1 [shape = 'u32[144,128]{1,0:T(1,128)}', space=vmem, size = 0x12000, scoped, tag = 'internal scratch']
  %s0 = inlined_call_operand.vmem [shape: f32[8,32], index: 0, kind: input, shape index: {}]
  %s1 = inlined_call_operand.vmem [shape: s32[8,1], index: 1, kind: input, shape index: {}]
  %s2 = inlined_call_operand.hbm [shape: f32[1,1], index: 2, kind: output, shape index: {}]
  %s3 = sld [smem:[#allocation0]]
  $region26: #{tpu_custom_call.1} parent=0
    _
  %s5 = ssub.s32 1, %s3
  %s6 = scalar_select 0, %s5, %s3
  $region1: #{tpu_custom_call.1} parent=0
    #allocation2 [shape = 'u8[512]{0}', space=vmem, size = 0x400, scoped, tag = 'output window, operand 0, single buffered']
    #allocation3 [shape = 's32[1]{0}', space=sflag, size = 0x4, scoped, tag = 'scoped memory for tpu_custom_call.1']
    %7 = vsyncpa [#allocation3], 0
    // Predicated region
    $region2: #{tpu_custom_call.1} parent=1 // pred_check
      _
    $region3: #{tpu_custom_call.1} parent=1 // pred_check_branch
      %9 = sbr.rel (0) target = $region5
    $region4: #{tpu_custom_call.1} parent=1 // pred_region
      _
    $region5: #{tpu_custom_call.1} parent=1 // pred_fallthru
      _
    // Predicated region
    $region6: #{tpu_custom_call.1} parent=1 // pred_check
      _
    $region7: #{tpu_custom_call.1} parent=1 // pred_check_branch
      %11 = sbr.rel (0) target = $region9
    $region8: #{tpu_custom_call.1} parent=1 // pred_region
      _
    $region9: #{tpu_custom_call.1} parent=1 // pred_fallthru
      _
    %p12 = scmp.eq.s32.totalorder 0, 0
    // Predicated region
    $region10: #{tpu_custom_call.1} parent=1 // pred_check
      %p13 = pneg %p12
    $region11: #{tpu_custom_call.1} parent=1 // pred_check_branch
      %15 = sbr.rel (%p13) target = $region13
    $region12: #{tpu_custom_call.1} parent=1 // pred_region
      %vm16 = vcmask 0
      %17 = vst.msk [vmem:[#allocation2] sm:$0x1] %vm16, 0.0
    $region13: #{tpu_custom_call.1} parent=1 // pred_fallthru
      _
    %v18 = vld [vmem:[%s0] sm:$0xff]
    %s19 = smul.u32 0, 8
    %v20 = vlaneseq
    %v21 = vshrl.u32 %v20, 7
    %v22 = vstv %s19
    %v23 = vadd.s32 %v22, %v21
    %vm24 = vcmp.lt.s32.totalorder %v23, 8
    %v25 = vsel %vm24, 1, 0
    %vm26 = vcmp.eq.s32.totalorder %v25, 1
    %v27 = vsel %vm26, %v18, 0.0
    %vm28 = vcmask 261120
    %v29 = vsel %vm28, %v27, -inf
    %30 = vmax.xlane.f32.xlu0 %v29
    %v31 = vpop.xlane.xlu0 %30
    %v32 = vsub.f32 %v27, %v31
    %v33 = vmul.f32 %v32, 1.442695
    %v34 = vpow.pop %v33
    %v35 = vsel %vm28, %v34, 0.0
    %36 = vadd.xlane.f32.xlu0 %v35
    %v37 = vpop.xlane.xlu0 %36
    %v38 = vlog2.pop %v37
    %v39 = vmul.f32 %v38, 0.6931472
    %v40 = vrcp.pop %v37
    %v41 = vlaneseq
    %v42 = vand.u32 %v41, 127
    %v43 = vld [vmem:[%s1] sm:$0xff]
    %44 = vset.pattern.permute.xlu0 0
    %45 = vperm.xlu0 %44, %v43
    %v46 = vpop.permute.xlu0 %45
    %vm47 = vcmp.eq.s32.totalorder %v42, %v46
    %v48 = vsel %vm47, %v32, 0.0
    %v49 = vsel %vm28, %v48, 0.0
    %50 = vadd.xlane.f32.xlu0 %v49
    %v51 = vpop.xlane.xlu0 %50
    %v52 = vsub.f32 %v39, %v51
    %v53 = vmul.f32 %v34, %v32
    %v54 = vsel %vm28, %v53, 0.0
    %55 = vadd.xlane.f32.xlu0 %v54
    %v56 = vpop.xlane.xlu0 %55
    %v57 = vmul.f32 %v56, %v40
    %v58 = vsub.f32 %v39, %v57
    %v59 = vmul.f32 %v58, 0.1
    %v60 = vsub.f32 %v52, %v59
    %v61 = vsel %vm24, %v60, 0.0
    %v62 = vld [vmem:[#allocation2] sm:$0x1]
    %vm63 = vcmask 7168
    %v64 = vsel %vm63, %v61, 0.0
    %65 = vadd.xlane.f32.xlu0 %v64
    %v66 = vpop.xlane.xlu0 %65
    %v67 = vrot.slane %v66, 4
    %v68 = vadd.f32 %v66, %v67
    %v69 = vrot.slane %v68, 2
    %v70 = vadd.f32 %v68, %v69
    %v71 = vrot.slane %v70, 1
    %v72 = vadd.f32 %v70, %v71
    %s73 = vtos %v72
    %v74 = vstv %s73
    %v75 = vadd.f32 %v62, %v74
    %vm76 = vcmask 0
    %77 = vst.msk [vmem:[#allocation2] sm:$0x1] %vm76, %v75
    // Predicated region
    $region14: #{tpu_custom_call.1} parent=1 // pred_check
      %p78 = pneg %p12
    $region15: #{tpu_custom_call.1} parent=1 // pred_check_branch
      %80 = sbr.rel (%p78) target = $region17
    $region16: #{tpu_custom_call.1} parent=1 // pred_region
      %v81 = vld [vmem:[#allocation2] sm:$0x1]
      %v82 = vmul.f32 %v81, 0.125
      %83 = vst.msk [vmem:[#allocation2] sm:$0x1] %vm76, %v82
    $region17: #{tpu_custom_call.1} parent=1 // pred_fallthru
      _
    // Predicated region
    $region18: #{tpu_custom_call.1} parent=1 // pred_check
      _
    $region19: #{tpu_custom_call.1} parent=1 // pred_check_branch
      %85 = sbr.rel (0) target = $region21
    $region20: #{tpu_custom_call.1} parent=1 // pred_region
      %s87 = ssub.s32 16, 16
      %88 = vsyncadd [#allocation3], %s87
      %s90 = sshll.u32 [#allocation2], 4
      %s91 = int_to_ptr.vmem [resolvable:$true] %s90
      %93 = dma.vmem_to_hbm [thread:$0]  %s91, 16, %s2, [#allocation3]
    $region21: #{tpu_custom_call.1} parent=1 // pred_fallthru
      _
    // Predicated region
    $region22: #{tpu_custom_call.1} parent=1 // pred_check
      _
    $region23: #{tpu_custom_call.1} parent=1 // pred_check_branch
      %95 = sbr.rel (0) target = $region25
    $region24: #{tpu_custom_call.1} parent=1 // pred_region
      %96 = dma.done [#allocation3], 16
    $region25: #{tpu_custom_call.1} parent=1 // pred_fallthru
      _
    %97 = vsyncpa [#allocation3], 1

</llo_original>
